<compile_context>
chip_gen: v7x
topology: tpu7x:2x2x1
jax: 0.10.0
libtpu: 0.0.40
codegen_flags: <defaults>
</compile_context>

<pallas_src>
import jax
import jax.numpy as jnp
from jax.experimental import pallas as pl
from jax.experimental.pallas import tpu as pltpu

EPS = 1e-5
SIG_MIN = 1e-5


def _fm_loss_kernel(t_ref, x1_ref, x0_ref, cond_ref,
                    w1x_ref, w1c_ref, w1t_ref, b1_ref, w2_ref, b2_ref,
                    loss_ref):
    t = t_ref[...]                                    # (B, 1)  read once
    x1 = x1_ref[...]                                  # (B, D)
    x0 = x0_ref[...]                                  # (B, D)

    # Target vector field first, then reuse it:
    #   psi_t = x0 + t * dpsi_dt  ==  t*x1 + (1 - (1-sig_min)*t)*x0
    dpsi_dt = x1 - (1.0 - SIG_MIN) * x0               # (B, D)
    psi_t = x0 + t * dpsi_dt                          # (B, D)

    # First layer: two small MXU dots (avoids an unaligned lane-axis concat);
    # the time term is a VPU broadcast multiply (no degenerate K=1 MXU pass).
    h = jnp.dot(psi_t, w1x_ref[...], preferred_element_type=jnp.float32)
    h = h + jnp.dot(cond_ref[...], w1c_ref[...],
                    preferred_element_type=jnp.float32)
    h = jnp.tanh(h + t * w1t_ref[...] + b1_ref[...])             # (B, H)

    score = jnp.dot(h, w2_ref[...],
                    preferred_element_type=jnp.float32) + b2_ref[...]  # (B, D)

    # Two-stage reduction: lane axis (XLU) first, then the (B,1) column.
    # 1/n is folded into the final scalar only (keeps it off the (B,D) vregs).
    diff = score - dpsi_dt
    row = jnp.sum(diff * diff, axis=-1, keepdims=True)           # (B, 1)
    n = diff.shape[0] * diff.shape[1]
    loss_ref[0, 0] = jnp.sum(row) * (1.0 / float(n))             # scalar -> SMEM


def ot_cond_flow_matching_loss(x1, x0, cond, t, params):
    """Pallas-backed forward of OT_cond_flow_matching. Returns scalar loss."""
    w1x, w1t, w1c, b1, w2, b2 = params
    B, D = x1.shape
    C = cond.shape[1]
    H = w1x.shape[1]

    t2d = t.reshape(-1, 1).astype(jnp.float32)

    vmem = pl.BlockSpec(memory_space=pltpu.MemorySpace.VMEM)
    smem = pl.BlockSpec(memory_space=pltpu.MemorySpace.SMEM)

    flops = (2 * B * D * H + 2 * B * C * H + 2 * B * H * D
             + 10 * B * D + 4 * B * H)
    bytes_accessed = 4 * (B + 2 * B * D + B * C
                          + D * H + C * H + 2 * H + H * D + D + 1)
    cost = pl.CostEstimate(flops=flops,
                           transcendentals=B * H,     # tanh
                           bytes_accessed=bytes_accessed)

    out = pl.pallas_call(
        _fm_loss_kernel,
        out_shape=jax.ShapeDtypeStruct((1, 1), jnp.float32),
        in_specs=[vmem] * 10,
        out_specs=smem,               # scalar loss -> SMEM
        cost_estimate=cost,
    )(t2d, x1, x0, cond, w1x, w1c, w1t, b1, w2, b2)
    return out[0, 0]


def _reference_loss(x1, x0, cond, t, params):
    """Pure-JAX reference (matches the PyTorch module's forward)."""
    w1x, w1t, w1c, b1, w2, b2 = params
    t2d = t.reshape(-1, 1)
    psi_t = t2d * x1 + (1.0 - (1.0 - SIG_MIN) * t2d) * x0
    dpsi_dt = x1 - (1.0 - SIG_MIN) * x0
    h = jnp.tanh(psi_t @ w1x + t2d @ w1t + cond @ w1c + b1)
    score = h @ w2 + b2
    return jnp.mean((score - dpsi_dt) ** 2)


def make_score_net_params(key, D, C, H):
    """Deterministic synthetic score_net (MLP vector field) parameters."""
    k1, k2, k3, k4 = jax.random.split(key, 4)
    w1x = jax.random.normal(k1, (D, H), jnp.float32) * 0.1
    w1t = jax.random.normal(k2, (1, H), jnp.float32) * 0.1
    w1c = jax.random.normal(k3, (C, H), jnp.float32) * 0.1
    b1 = jnp.zeros((1, H), jnp.float32)
    w2 = jax.random.normal(k4, (H, D), jnp.float32) * 0.1
    b2 = jnp.zeros((1, D), jnp.float32)
    return (w1x, w1t, w1c, b1, w2, b2)


if __name__ == "__main__":
    B, D, C, H = 8, 32, 16, 64

    key = jax.random.PRNGKey(0)
    k_x1, k_x0, k_cond, k_t, k_params = jax.random.split(key, 5)

    x1 = jax.random.normal(k_x1, (B, D), jnp.float32)
    x0 = jax.random.normal(k_x0, (B, D), jnp.float32)
    cond = jax.random.normal(k_cond, (B, C), jnp.float32)
    params = make_score_net_params(k_params, D, C, H)

    # t = (rand(1) + arange(B)/B) % (1 - eps), same semantics as the torch code
    u = jax.random.uniform(k_t, (1,), jnp.float32)
    t = (u + jnp.arange(B, dtype=jnp.float32) / B) % (1.0 - EPS)

    loss = ot_cond_flow_matching_loss(x1, x0, cond, t, params)
    loss = jax.block_until_ready(loss)

    ref = jax.block_until_ready(_reference_loss(x1, x0, cond, t, params))
    assert jnp.allclose(loss, ref, rtol=1e-4, atol=1e-5), (loss, ref)

    print("KERNEL_OK")
</pallas_src>

<mosaic_0001>
module attributes {stable_mosaic.version = 11 : i64} {
  func.func @_fm_loss_kernel(%arg0: memref<8x1xf32, #tpu.memory_space<vmem>>, %arg1: memref<8x32xf32, #tpu.memory_space<vmem>>, %arg2: memref<8x32xf32, #tpu.memory_space<vmem>>, %arg3: memref<8x16xf32, #tpu.memory_space<vmem>>, %arg4: memref<32x64xf32, #tpu.memory_space<vmem>>, %arg5: memref<16x64xf32, #tpu.memory_space<vmem>>, %arg6: memref<1x64xf32, #tpu.memory_space<vmem>>, %arg7: memref<1x64xf32, #tpu.memory_space<vmem>>, %arg8: memref<64x32xf32, #tpu.memory_space<vmem>>, %arg9: memref<1x32xf32, #tpu.memory_space<vmem>>, %arg10: memref<1x1xf32, #tpu.memory_space<smem>>) attributes {dimension_semantics = [], scalar_prefetch = 0 : i64, scratch_operands = 0 : i64, tpu.core_type = #tpu.core_type<tc>} {
    %c0 = arith.constant 0 : index
    %c0_0 = arith.constant 0 : index
    %0 = vector.load %arg0[%c0, %c0_0] : memref<8x1xf32, #tpu.memory_space<vmem>>, vector<8x1xf32>
    %c0_1 = arith.constant 0 : index
    %c0_2 = arith.constant 0 : index
    %1 = vector.load %arg1[%c0_1, %c0_2] : memref<8x32xf32, #tpu.memory_space<vmem>>, vector<8x32xf32>
    %c0_3 = arith.constant 0 : index
    %c0_4 = arith.constant 0 : index
    %2 = vector.load %arg2[%c0_3, %c0_4] : memref<8x32xf32, #tpu.memory_space<vmem>>, vector<8x32xf32>
    %cst = arith.constant 0.999989986 : f32
    %3 = vector.broadcast %cst : f32 to vector<8x32xf32>
    %4 = arith.mulf %3, %2 : vector<8x32xf32>
    %5 = arith.subf %1, %4 : vector<8x32xf32>
    %6 = vector.broadcast %0 : vector<8x1xf32> to vector<8x32xf32>
    %7 = arith.mulf %6, %5 : vector<8x32xf32>
    %8 = arith.addf %2, %7 : vector<8x32xf32>
    %c0_5 = arith.constant 0 : index
    %c0_6 = arith.constant 0 : index
    %9 = vector.load %arg4[%c0_5, %c0_6] : memref<32x64xf32, #tpu.memory_space<vmem>>, vector<32x64xf32>
    %cst_7 = arith.constant dense<0.000000e+00> : vector<8x64xf32>
    %10 = tpu.matmul %8, %9, %cst_7 {dimension_numbers = #tpu.dot_dimension_numbers<[1], [0], [0], [1], [0, 0, 1, 1], [], []>} : vector<8x32xf32>, vector<32x64xf32>, vector<8x64xf32> -> vector<8x64xf32>
    %c0_8 = arith.constant 0 : index
    %c0_9 = arith.constant 0 : index
    %11 = vector.load %arg3[%c0_8, %c0_9] : memref<8x16xf32, #tpu.memory_space<vmem>>, vector<8x16xf32>
    %c0_10 = arith.constant 0 : index
    %c0_11 = arith.constant 0 : index
    %12 = vector.load %arg5[%c0_10, %c0_11] : memref<16x64xf32, #tpu.memory_space<vmem>>, vector<16x64xf32>
    %cst_12 = arith.constant dense<0.000000e+00> : vector<8x64xf32>
    %13 = tpu.matmul %11, %12, %cst_12 {dimension_numbers = #tpu.dot_dimension_numbers<[1], [0], [0], [1], [0, 0, 1, 1], [], []>} : vector<8x16xf32>, vector<16x64xf32>, vector<8x64xf32> -> vector<8x64xf32>
    %14 = arith.addf %10, %13 : vector<8x64xf32>
    %c0_13 = arith.constant 0 : index
    %c0_14 = arith.constant 0 : index
    %15 = vector.load %arg6[%c0_13, %c0_14] : memref<1x64xf32, #tpu.memory_space<vmem>>, vector<1x64xf32>
    %16 = vector.broadcast %0 : vector<8x1xf32> to vector<8x64xf32>
    %17 = vector.broadcast %15 : vector<1x64xf32> to vector<8x64xf32>
    %18 = arith.mulf %16, %17 : vector<8x64xf32>
    %19 = arith.addf %14, %18 : vector<8x64xf32>
    %c0_15 = arith.constant 0 : index
    %c0_16 = arith.constant 0 : index
    %20 = vector.load %arg7[%c0_15, %c0_16] : memref<1x64xf32, #tpu.memory_space<vmem>>, vector<1x64xf32>
    %21 = vector.broadcast %20 : vector<1x64xf32> to vector<8x64xf32>
    %22 = arith.addf %19, %21 : vector<8x64xf32>
    %23 = math.tanh %22 : vector<8x64xf32>
    %c0_17 = arith.constant 0 : index
    %c0_18 = arith.constant 0 : index
    %24 = vector.load %arg8[%c0_17, %c0_18] : memref<64x32xf32, #tpu.memory_space<vmem>>, vector<64x32xf32>
    %cst_19 = arith.constant dense<0.000000e+00> : vector<8x32xf32>
    %25 = tpu.matmul %23, %24, %cst_19 {dimension_numbers = #tpu.dot_dimension_numbers<[1], [0], [0], [1], [0, 0, 1, 1], [], []>} : vector<8x64xf32>, vector<64x32xf32>, vector<8x32xf32> -> vector<8x32xf32>
    %c0_20 = arith.constant 0 : index
    %c0_21 = arith.constant 0 : index
    %26 = vector.load %arg9[%c0_20, %c0_21] : memref<1x32xf32, #tpu.memory_space<vmem>>, vector<1x32xf32>
    %27 = vector.broadcast %26 : vector<1x32xf32> to vector<8x32xf32>
    %28 = arith.addf %25, %27 : vector<8x32xf32>
    %29 = arith.subf %28, %5 : vector<8x32xf32>
    %30 = arith.mulf %29, %29 : vector<8x32xf32>
    %cst_22 = arith.constant dense<0.000000e+00> : vector<8xf32>
    %31 = vector.multi_reduction <add>, %30, %cst_22 [1] : vector<8x32xf32> to vector<8xf32>
    %32 = vector.shape_cast %31 : vector<8xf32> to vector<8x1xf32>
    %33 = vector.shape_cast %32 : vector<8x1xf32> to vector<1x8x1xf32>
    %cst_23 = arith.constant dense<0.000000e+00> : vector<1xf32>
    %34 = vector.multi_reduction <add>, %33, %cst_23 [1, 2] : vector<1x8x1xf32> to vector<1xf32>
    %35 = vector.shape_cast %34 : vector<1xf32> to vector<1x1x1xf32>
    %36 = vector.extract %35[0, 0, 0] : f32 from vector<1x1x1xf32>
    %cst_24 = arith.constant 3.906250e-03 : f32
    %37 = arith.mulf %36, %cst_24 : f32
    %c0_25 = arith.constant 0 : index
    %c0_26 = arith.constant 0 : index
    %38 = memref.load %arg10[%c0_25, %c0_26] : memref<1x1xf32, #tpu.memory_space<smem>>
    memref.store %37, %arg10[%c0_25, %c0_26] : memref<1x1xf32, #tpu.memory_space<smem>>
    return
  }
}

</mosaic_0001>

<llo_original>
// kernel: tpu_custom_call.1
$region0: #{tpu_custom_call.1}
  #allocation0 [shape = 'u32[]', space=smem, size = 0x4, offset = 0x4, fixed_abs, tag = 'smem constant byte address 0x4 - core index']
  #allocation1 [shape = 'u32[144,128]{1,0:T(1,128)}', space=vmem, size = 0x12000, scoped, tag = 'internal scratch']
  %s0 = inlined_call_operand.vmem [shape: f32[8,1], index: 0, kind: input, shape index: {}]
  %s1 = inlined_call_operand.vmem [shape: f32[8,32], index: 1, kind: input, shape index: {}]
  %s2 = inlined_call_operand.vmem [shape: f32[8,32], index: 2, kind: input, shape index: {}]
  %s3 = inlined_call_operand.vmem [shape: f32[8,16], index: 3, kind: input, shape index: {}]
  %s4 = inlined_call_operand.vmem [shape: f32[32,64], index: 4, kind: input, shape index: {}]
  %s5 = inlined_call_operand.vmem [shape: f32[16,64], index: 5, kind: input, shape index: {}]
  %s6 = inlined_call_operand.vmem [shape: f32[1,64], index: 6, kind: input, shape index: {}]
  %s7 = inlined_call_operand.vmem [shape: f32[1,64], index: 7, kind: input, shape index: {}]
  %s8 = inlined_call_operand.vmem [shape: f32[64,32], index: 8, kind: input, shape index: {}]
  %s9 = inlined_call_operand.vmem [shape: f32[1,32], index: 9, kind: input, shape index: {}]
  %s10 = inlined_call_operand.hbm [shape: f32[1,1], index: 10, kind: output, shape index: {}]
  %s11 = sld [smem:[#allocation0]]
  $region50: #{tpu_custom_call.1} parent=0
    _
  %s13 = ssub.s32 1, %s11
  %s14 = scalar_select 0, %s13, %s11
  $region1: #{tpu_custom_call.1} parent=0
    #allocation2 [shape = 'u8[512]{0}', space=smem, size = 0x200, scoped, tag = 'output window, operand 0, single buffered']
    #allocation3 [shape = 's32[1]{0}', space=sflag, size = 0x4, scoped, tag = 'scoped memory for tpu_custom_call.1']
    %15 = vsyncpa [#allocation3], 0
    // Predicated region
    $region2: #{tpu_custom_call.1} parent=1 // pred_check
      _
    $region3: #{tpu_custom_call.1} parent=1 // pred_check_branch
      %17 = sbr.rel (0) target = $region5
    $region4: #{tpu_custom_call.1} parent=1 // pred_region
      _
    $region5: #{tpu_custom_call.1} parent=1 // pred_fallthru
      _
    // Predicated region
    $region6: #{tpu_custom_call.1} parent=1 // pred_check
      _
    $region7: #{tpu_custom_call.1} parent=1 // pred_check_branch
      %19 = sbr.rel (0) target = $region9
    $region8: #{tpu_custom_call.1} parent=1 // pred_region
      _
    $region9: #{tpu_custom_call.1} parent=1 // pred_fallthru
      _
    // Predicated region
    $region10: #{tpu_custom_call.1} parent=1 // pred_check
      _
    $region11: #{tpu_custom_call.1} parent=1 // pred_check_branch
      %21 = sbr.rel (0) target = $region13
    $region12: #{tpu_custom_call.1} parent=1 // pred_region
      _
    $region13: #{tpu_custom_call.1} parent=1 // pred_fallthru
      _
    // Predicated region
    $region14: #{tpu_custom_call.1} parent=1 // pred_check
      _
    $region15: #{tpu_custom_call.1} parent=1 // pred_check_branch
      %23 = sbr.rel (0) target = $region17
    $region16: #{tpu_custom_call.1} parent=1 // pred_region
      _
    $region17: #{tpu_custom_call.1} parent=1 // pred_fallthru
      _
    // Predicated region
    $region18: #{tpu_custom_call.1} parent=1 // pred_check
      _
    $region19: #{tpu_custom_call.1} parent=1 // pred_check_branch
      %25 = sbr.rel (0) target = $region21
    $region20: #{tpu_custom_call.1} parent=1 // pred_region
      _
    $region21: #{tpu_custom_call.1} parent=1 // pred_fallthru
      _
    // Predicated region
    $region22: #{tpu_custom_call.1} parent=1 // pred_check
      _
    $region23: #{tpu_custom_call.1} parent=1 // pred_check_branch
      %27 = sbr.rel (0) target = $region25
    $region24: #{tpu_custom_call.1} parent=1 // pred_region
      _
    $region25: #{tpu_custom_call.1} parent=1 // pred_fallthru
      _
    // Predicated region
    $region26: #{tpu_custom_call.1} parent=1 // pred_check
      _
    $region27: #{tpu_custom_call.1} parent=1 // pred_check_branch
      %29 = sbr.rel (0) target = $region29
    $region28: #{tpu_custom_call.1} parent=1 // pred_region
      _
    $region29: #{tpu_custom_call.1} parent=1 // pred_fallthru
      _
    // Predicated region
    $region30: #{tpu_custom_call.1} parent=1 // pred_check
      _
    $region31: #{tpu_custom_call.1} parent=1 // pred_check_branch
      %31 = sbr.rel (0) target = $region33
    $region32: #{tpu_custom_call.1} parent=1 // pred_region
      _
    $region33: #{tpu_custom_call.1} parent=1 // pred_fallthru
      _
    // Predicated region
    $region34: #{tpu_custom_call.1} parent=1 // pred_check
      _
    $region35: #{tpu_custom_call.1} parent=1 // pred_check_branch
      %33 = sbr.rel (0) target = $region37
    $region36: #{tpu_custom_call.1} parent=1 // pred_region
      _
    $region37: #{tpu_custom_call.1} parent=1 // pred_fallthru
      _
    // Predicated region
    $region38: #{tpu_custom_call.1} parent=1 // pred_check
      _
    $region39: #{tpu_custom_call.1} parent=1 // pred_check_branch
      %35 = sbr.rel (0) target = $region41
    $region40: #{tpu_custom_call.1} parent=1 // pred_region
      _
    $region41: #{tpu_custom_call.1} parent=1 // pred_fallthru
      _
    %v36 = vld [vmem:[%s0] sm:$0xff]
    %v37 = vld [vmem:[%s1] sm:$0xff]
    %v38 = vld [vmem:[%s2] sm:$0xff]
    %v39 = vmul.f32 %v38, 0.99999
    %v40 = vsub.f32 %v37, %v39
    %42 = vset.pattern.permute.xlu0 0
    %43 = vperm.xlu0 %42, %v36
    %v44 = vpop.permute.xlu0 %43
    %v46 = vmul.f32 %v44, %v40
    %v47 = vadd.f32 %v38, %v46
    %v48 = vld [vmem:[%s4] sm:$0xff]
    %v49 = vld [vmem:[%s4 + $0x8] sm:$0xff]
    %v50 = vld [vmem:[%s4 + $0x10] sm:$0xff]
    %v51 = vld [vmem:[%s4 + $0x18] sm:$0xff]
    %v52 = vld [vmem:[%s3] sm:$0xff]
    %v53 = vld [vmem:[%s5] sm:$0xff]
    %v54 = vld [vmem:[%s5 + $0x8] sm:$0xff]
    %vm55 = vcmask 130048
    %v57 = vsel %vm55, %v52, 0
    %59 = vmatprep.subr.mxu0 0.0
    %60 = vmatpush1.msra.mxu0 %v53
    %61 = vmatprep.subr.mxu0 0.0
    %62 = vmatpush1.msra.mxu0 %v54
    %63 = vmatprep.subr.mxu0 0.0
    %64 = vmatpush1.msra.mxu0 0.0
    %65 = vmatprep.subr.mxu0 0.0
    %66 = vmatpush1.msra.mxu0 0.0
    %67 = vmatprep.subr.mxu0 0.0
    %68 = vmatpush1.msra.mxu0 0.0
    %69 = vmatprep.subr.mxu0 0.0
    %70 = vmatpush1.msra.mxu0 0.0
    %71 = vmatprep.subr.mxu0 0.0
    %72 = vmatpush1.msra.mxu0 0.0
    %73 = vmatprep.subr.mxu0 0.0
    %74 = vmatpush1.msra.mxu0 0.0
    %75 = vmatprep.subr.mxu0 0.0
    %76 = vmatpush1.msra.mxu0 0.0
    %77 = vmatprep.subr.mxu0 0.0
    %78 = vmatpush1.msra.mxu0 0.0
    %79 = vmatprep.subr.mxu0 0.0
    %80 = vmatpush1.msra.mxu0 0.0
    %81 = vmatprep.subr.mxu0 0.0
    %82 = vmatpush1.msra.mxu0 0.0
    %83 = vmatprep.subr.mxu0 0.0
    %84 = vmatpush1.msra.mxu0 0.0
    %85 = vmatprep.subr.mxu0 0.0
    %86 = vmatpush1.msra.mxu0 0.0
    %87 = vmatprep.subr.mxu0 0.0
    %88 = vmatpush1.msra.mxu0 0.0
    %89 = vmatprep.subr.mxu0 0.0
    %90 = vmatpush1.msra.mxu0 0.0
    %91 = vmatprep.subr.mxu0 0.0
    %92 = vmatpush1.msra.mxu0 0.0
    %93 = vmatprep.subr.mxu0 0.0
    %94 = vmatpush1.msra.mxu0 0.0
    %95 = vmatprep.subr.mxu0 0.0
    %96 = vmatpush1.msra.mxu0 0.0
    %97 = vmatprep.subr.mxu0 0.0
    %98 = vmatpush1.msra.mxu0 0.0
    %99 = vmatprep.subr.mxu0 0.0
    %100 = vmatpush1.msra.mxu0 0.0
    %101 = vmatprep.subr.mxu0 0.0
    %102 = vmatpush1.msra.mxu0 0.0
    %103 = vmatprep.subr.mxu0 0.0
    %104 = vmatpush1.msra.mxu0 0.0
    %105 = vmatprep.subr.mxu0 0.0
    %106 = vmatpush1.msra.mxu0 0.0
    %107 = vmatprep.subr.mxu0 0.0
    %108 = vmatpush1.msra.mxu0 0.0
    %109 = vmatprep.subr.mxu0 0.0
    %110 = vmatpush1.msra.mxu0 0.0
    %111 = vmatprep.subr.mxu0 0.0
    %112 = vmatpush1.msra.mxu0 0.0
    %113 = vmatprep.subr.mxu0 0.0
    %114 = vmatpush1.msra.mxu0 0.0
    %115 = vmatprep.subr.mxu0 0.0
    %116 = vmatpush1.msra.mxu0 0.0
    %117 = vmatprep.subr.mxu0 0.0
    %118 = vmatpush1.msra.mxu0 0.0
    %119 = vmatprep.subr.mxu0 0.0
    %120 = vmatpush1.msra.mxu0 0.0
    %121 = vmatprep.subr.mxu0 0.0
    %122 = vmatpush1.msra.mxu0 0.0
    %123 = vmatprep.mubr.f32.mxu0 0.0
    %124 = vmatmul.mubr.f32.gmra.mrb[0].mxu0 %v57
    %v125 = vpop.f32.mrb[0].mxu0
    %v126 = vadd.f32 0.0, %v125
    %v127 = vpop.f32.mrb[0].mxu0
    %128 = vdwg.mxu0
    %vm129 = vcmask 261120
    %v131 = vsel %vm129, %v47, 0
    %133 = vmatprep.subr.mxu0 0.0
    %134 = vmatpush1.msra.mxu0 %v48
    %135 = vmatprep.subr.mxu0 0.0
    %136 = vmatpush1.msra.mxu0 %v49
    %137 = vmatprep.subr.mxu0 0.0
    %138 = vmatpush1.msra.mxu0 %v50
    %139 = vmatprep.subr.mxu0 0.0
    %140 = vmatpush1.msra.mxu0 %v51
    %141 = vmatprep.subr.mxu0 0.0
    %142 = vmatpush1.msra.mxu0 0.0
    %143 = vmatprep.subr.mxu0 0.0
    %144 = vmatpush1.msra.mxu0 0.0
    %145 = vmatprep.subr.mxu0 0.0
    %146 = vmatpush1.msra.mxu0 0.0
    %147 = vmatprep.subr.mxu0 0.0
    %148 = vmatpush1.msra.mxu0 0.0
    %149 = vmatprep.subr.mxu0 0.0
    %150 = vmatpush1.msra.mxu0 0.0
    %151 = vmatprep.subr.mxu0 0.0
    %152 = vmatpush1.msra.mxu0 0.0
    %153 = vmatprep.subr.mxu0 0.0
    %154 = vmatpush1.msra.mxu0 0.0
    %155 = vmatprep.subr.mxu0 0.0
    %156 = vmatpush1.msra.mxu0 0.0
    %157 = vmatprep.subr.mxu0 0.0
    %158 = vmatpush1.msra.mxu0 0.0
    %159 = vmatprep.subr.mxu0 0.0
    %160 = vmatpush1.msra.mxu0 0.0
    %161 = vmatprep.subr.mxu0 0.0
    %162 = vmatpush1.msra.mxu0 0.0
    %163 = vmatprep.subr.mxu0 0.0
    %164 = vmatpush1.msra.mxu0 0.0
    %165 = vmatprep.subr.mxu0 0.0
    %166 = vmatpush1.msra.mxu0 0.0
    %167 = vmatprep.subr.mxu0 0.0
    %168 = vmatpush1.msra.mxu0 0.0
    %169 = vmatprep.subr.mxu0 0.0
    %170 = vmatpush1.msra.mxu0 0.0
    %171 = vmatprep.subr.mxu0 0.0
    %172 = vmatpush1.msra.mxu0 0.0
    %173 = vmatprep.subr.mxu0 0.0
    %174 = vmatpush1.msra.mxu0 0.0
    %175 = vmatprep.subr.mxu0 0.0
    %176 = vmatpush1.msra.mxu0 0.0
    %177 = vmatprep.subr.mxu0 0.0
    %178 = vmatpush1.msra.mxu0 0.0
    %179 = vmatprep.subr.mxu0 0.0
    %180 = vmatpush1.msra.mxu0 0.0
    %181 = vmatprep.subr.mxu0 0.0
    %182 = vmatpush1.msra.mxu0 0.0
    %183 = vmatprep.subr.mxu0 0.0
    %184 = vmatpush1.msra.mxu0 0.0
    %185 = vmatprep.subr.mxu0 0.0
    %186 = vmatpush1.msra.mxu0 0.0
    %187 = vmatprep.subr.mxu0 0.0
    %188 = vmatpush1.msra.mxu0 0.0
    %189 = vmatprep.subr.mxu0 0.0
    %190 = vmatpush1.msra.mxu0 0.0
    %191 = vmatprep.subr.mxu0 0.0
    %192 = vmatpush1.msra.mxu0 0.0
    %193 = vmatprep.subr.mxu0 0.0
    %194 = vmatpush1.msra.mxu0 0.0
    %195 = vmatprep.subr.mxu0 0.0
    %196 = vmatpush1.msra.mxu0 0.0
    %197 = vmatprep.mubr.f32.mxu0 0.0
    %198 = vmatmul.mubr.f32.gmra.mrb[0].mxu0 %v131
    %v199 = vpop.f32.mrb[0].mxu0
    %v200 = vadd.f32 %v126, %v199
    %v201 = vpop.f32.mrb[0].mxu0
    %202 = vdwg.mxu0
    %v203 = vld [vmem:[%s6] sm:$0x1]
    %v205 = vlaneseq
    %v206 = vshrl.u32 %v205, 7
    %v207 = vsub.s32 0, %v206
    %v208 = vrot.slane %v203, %v207
    %v210 = vmul.f32 %v44, %v208
    %v211 = vadd.f32 %v200, %v210
    %v212 = vld [vmem:[%s7] sm:$0x1]
    %v214 = vlaneseq
    %v215 = vshrl.u32 %v214, 7
    %v216 = vsub.s32 0, %v215
    %v217 = vrot.slane %v212, %v216
    %v219 = vadd.f32 %v211, %v217
    %v220 = vtanh.pop %v219
    %v221 = vld [vmem:[%s8] sm:$0xff]
    %v222 = vld [vmem:[%s8 + $0x8] sm:$0xff]
    %v223 = vld [vmem:[%s8 + $0x10] sm:$0xff]
    %v224 = vld [vmem:[%s8 + $0x18] sm:$0xff]
    %v225 = vld [vmem:[%s8 + $0x20] sm:$0xff]
    %v226 = vld [vmem:[%s8 + $0x28] sm:$0xff]
    %v227 = vld [vmem:[%s8 + $0x30] sm:$0xff]
    %v228 = vld [vmem:[%s8 + $0x38] sm:$0xff]
    %v229 = vld [vmem:[%s9] sm:$0x1]
    %v231 = vlaneseq
    %v232 = vshrl.u32 %v231, 7
    %v233 = vsub.s32 0, %v232
    %v234 = vrot.slane %v229, %v233
    %vm236 = vcmask 523264
    %v238 = vsel %vm236, %v220, 0
    %240 = vmatprep.subr.mxu0 0.0
    %241 = vmatpush1.msra.mxu0 %v221
    %242 = vmatprep.subr.mxu0 0.0
    %243 = vmatpush1.msra.mxu0 %v222
    %244 = vmatprep.subr.mxu0 0.0
    %245 = vmatpush1.msra.mxu0 %v223
    %246 = vmatprep.subr.mxu0 0.0
    %247 = vmatpush1.msra.mxu0 %v224
    %248 = vmatprep.subr.mxu0 0.0
    %249 = vmatpush1.msra.mxu0 %v225
    %250 = vmatprep.subr.mxu0 0.0
    %251 = vmatpush1.msra.mxu0 %v226
    %252 = vmatprep.subr.mxu0 0.0
    %253 = vmatpush1.msra.mxu0 %v227
    %254 = vmatprep.subr.mxu0 0.0
    %255 = vmatpush1.msra.mxu0 %v228
    %256 = vmatprep.subr.mxu0 0.0
    %257 = vmatpush1.msra.mxu0 0.0
    %258 = vmatprep.subr.mxu0 0.0
    %259 = vmatpush1.msra.mxu0 0.0
    %260 = vmatprep.subr.mxu0 0.0
    %261 = vmatpush1.msra.mxu0 0.0
    %262 = vmatprep.subr.mxu0 0.0
    %263 = vmatpush1.msra.mxu0 0.0
    %264 = vmatprep.subr.mxu0 0.0
    %265 = vmatpush1.msra.mxu0 0.0
    %266 = vmatprep.subr.mxu0 0.0
    %267 = vmatpush1.msra.mxu0 0.0
    %268 = vmatprep.subr.mxu0 0.0
    %269 = vmatpush1.msra.mxu0 0.0
    %270 = vmatprep.subr.mxu0 0.0
    %271 = vmatpush1.msra.mxu0 0.0
    %272 = vmatprep.subr.mxu0 0.0
    %273 = vmatpush1.msra.mxu0 0.0
    %274 = vmatprep.subr.mxu0 0.0
    %275 = vmatpush1.msra.mxu0 0.0
    %276 = vmatprep.subr.mxu0 0.0
    %277 = vmatpush1.msra.mxu0 0.0
    %278 = vmatprep.subr.mxu0 0.0
    %279 = vmatpush1.msra.mxu0 0.0
    %280 = vmatprep.subr.mxu0 0.0
    %281 = vmatpush1.msra.mxu0 0.0
    %282 = vmatprep.subr.mxu0 0.0
    %283 = vmatpush1.msra.mxu0 0.0
    %284 = vmatprep.subr.mxu0 0.0
    %285 = vmatpush1.msra.mxu0 0.0
    %286 = vmatprep.subr.mxu0 0.0
    %287 = vmatpush1.msra.mxu0 0.0
    %288 = vmatprep.subr.mxu0 0.0
    %289 = vmatpush1.msra.mxu0 0.0
    %290 = vmatprep.subr.mxu0 0.0
    %291 = vmatpush1.msra.mxu0 0.0
    %292 = vmatprep.subr.mxu0 0.0
    %293 = vmatpush1.msra.mxu0 0.0
    %294 = vmatprep.subr.mxu0 0.0
    %295 = vmatpush1.msra.mxu0 0.0
    %296 = vmatprep.subr.mxu0 0.0
    %297 = vmatpush1.msra.mxu0 0.0
    %298 = vmatprep.subr.mxu0 0.0
    %299 = vmatpush1.msra.mxu0 0.0
    %300 = vmatprep.subr.mxu0 0.0
    %301 = vmatpush1.msra.mxu0 0.0
    %302 = vmatprep.subr.mxu0 0.0
    %303 = vmatpush1.msra.mxu0 0.0
    %304 = vmatprep.mubr.f32.mxu0 0.0
    %305 = vmatmul.mubr.f32.gmra.mrb[0].mxu0 %v238
    %v306 = vpop.f32.mrb[0].mxu0
    %v307 = vadd.f32 %v234, %v306
    %v308 = vpop.f32.mrb[0].mxu0
    %309 = vdwg.mxu0
    %v310 = vsub.f32 %v307, %v40
    %v311 = vmul.f32 %v310, %v310
    %v312 = vsel %vm129, %v311, 0.0
    %313 = vadd.xlane.f32.xlu0 %v312
    %v314 = vpop.xlane.xlu0 %313
    %vm315 = vcmask 7168
    %v316 = vsel %vm315, %v314, 0.0
    %317 = vadd.xlane.f32.xlu0 %v316
    %v318 = vpop.xlane.xlu0 %317
    %v319 = vrot.slane %v318, 4
    %v320 = vadd.f32 %v318, %v319
    %v321 = vrot.slane %v320, 2
    %v322 = vadd.f32 %v320, %v321
    %v323 = vrot.slane %v322, 1
    %v324 = vadd.f32 %v322, %v323
    %s325 = vtos %v324
    %s326 = smul.f32 %s325, 0.00390625
    %s327 = scalar_lea.smem [#allocation2], 0
    %328 = sst [smem:[%s327]] %s326
    // Predicated region
    $region42: #{tpu_custom_call.1} parent=1 // pred_check
      _
    $region43: #{tpu_custom_call.1} parent=1 // pred_check_branch
      %330 = sbr.rel (0) target = $region45
    $region44: #{tpu_custom_call.1} parent=1 // pred_region
      %s332 = ssub.s32 16, 16
      %333 = vsyncadd [#allocation3], %s332
      %336 = dma.smem_to_hbm [#allocation2], 16, %s10, [#allocation3]
    $region45: #{tpu_custom_call.1} parent=1 // pred_fallthru
      _
    // Predicated region
    $region46: #{tpu_custom_call.1} parent=1 // pred_check
      _
    $region47: #{tpu_custom_call.1} parent=1 // pred_check_branch
      %338 = sbr.rel (0) target = $region49
    $region48: #{tpu_custom_call.1} parent=1 // pred_region
      %339 = dma.done [#allocation3], 16
    $region49: #{tpu_custom_call.1} parent=1 // pred_fallthru
      _
    %340 = sfence
    %341 = vsyncpa [#allocation3], 1

</llo_original>
